<compile_context>
chip_gen: v7x
topology: tpu7x:2x2x1
jax: 0.10.0
libtpu: 0.0.40
codegen_flags: <defaults>
</compile_context>

<pallas_src>
import functools

import jax
import jax.numpy as jnp
from jax import lax
from jax.experimental import pallas as pl
from jax.experimental.pallas import tpu as pltpu

_STAMP = (8, 128)  # lane-dense per-tile scalar "stamp" (one f32 vreg)


def _pick_tile(total, preferred, align):
    """Largest tile <= preferred that is a multiple of `align` and divides
    `total`.  Falls back to the full extent when `total` is small or not
    align-divisible (block == full array dim is always legal)."""
    if total <= preferred:
        return total
    if total % align != 0:
        return total
    t = max((preferred // align) * align, align)
    while total % t != 0:
        t -= align
    return t


# ---------------------------------------------------------------------------
# Pass 1a: fused per-feature BatchNorm statistics for BOTH views.
# ---------------------------------------------------------------------------
def _stats_kernel(z1_ref, z2_ref, m1_ref, r1_ref, m2_ref, r2_ref,
                  s1, ss1, s2, ss2, *, n_rows, eps):
    k = pl.program_id(1)

    @pl.when(k == 0)
    def _init():
        s1[...] = jnp.zeros_like(s1)
        ss1[...] = jnp.zeros_like(ss1)
        s2[...] = jnp.zeros_like(s2)
        ss2[...] = jnp.zeros_like(ss2)

    z1 = z1_ref[...]
    z2 = z2_ref[...]
    s1[...] += jnp.sum(z1, axis=0, keepdims=True)
    ss1[...] += jnp.sum(z1 * z1, axis=0, keepdims=True)
    s2[...] += jnp.sum(z2, axis=0, keepdims=True)
    ss2[...] += jnp.sum(z2 * z2, axis=0, keepdims=True)

    @pl.when(k == pl.num_programs(1) - 1)
    def _finalize():
        inv_n = 1.0 / float(n_rows)
        # NOTE: single-pass E[z^2]-E[z]^2 variance (clamped at 0); adequate in
        # f32 for typical embedding magnitudes.
        m1 = s1[...] * inv_n
        v1 = jnp.maximum(ss1[...] * inv_n - m1 * m1, 0.0)
        m1_ref[...] = m1
        r1_ref[...] = lax.rsqrt(v1 + eps)
        m2 = s2[...] * inv_n
        v2 = jnp.maximum(ss2[...] * inv_n - m2 * m2, 0.0)
        m2_ref[...] = m2
        r2_ref[...] = lax.rsqrt(v2 + eps)


def _stats_call(z1p, z2p, *, td, bk, eps, vmem_limit):
    n, d_pad = z1p.shape
    nj, nk = d_pad // td, n // bk
    kernel = functools.partial(_stats_kernel, n_rows=n, eps=eps)
    return pl.pallas_call(
        kernel,
        out_shape=tuple(jax.ShapeDtypeStruct((1, d_pad), jnp.float32)
                        for _ in range(4)),
        grid_spec=pltpu.PrefetchScalarGridSpec(
            num_scalar_prefetch=0,
            grid=(nj, nk),
            in_specs=[pl.BlockSpec((bk, td), lambda j, k: (k, j)),
                      pl.BlockSpec((bk, td), lambda j, k: (k, j))],
            out_specs=[pl.BlockSpec((1, td), lambda j, k: (0, j))
                       for _ in range(4)],
            scratch_shapes=[pltpu.VMEM((1, td), jnp.float32)
                            for _ in range(4)],
        ),
        compiler_params=pltpu.CompilerParams(
            dimension_semantics=("parallel", "arbitrary"),
            vmem_limit_bytes=vmem_limit),
        cost_estimate=pl.CostEstimate(
            flops=int(6 * n * d_pad),
            transcendentals=int(2 * d_pad),
            bytes_accessed=int(2 * n * d_pad * 4 + 4 * d_pad * 4)),
    )(z1p, z2p)


# ---------------------------------------------------------------------------
# Pass 1b: pre-normalize both views and cast once (default bf16) to HBM.
# ---------------------------------------------------------------------------
def _normalize_kernel(z1_ref, z2_ref, m1_ref, r1_ref, m2_ref, r2_ref,
                      zn1_ref, zn2_ref):
    zn1_ref[...] = ((z1_ref[...] - m1_ref[...]) * r1_ref[...]).astype(zn1_ref.dtype)
    zn2_ref[...] = ((z2_ref[...] - m2_ref[...]) * r2_ref[...]).astype(zn2_ref.dtype)


def _normalize_call(z1p, z2p, m1, r1, m2, r2, *, td, bk, out_dtype, vmem_limit):
    n, d_pad = z1p.shape
    nj, nk = d_pad // td, n // bk
    elem = jnp.dtype(out_dtype).itemsize
    return pl.pallas_call(
        _normalize_kernel,
        out_shape=(jax.ShapeDtypeStruct((n, d_pad), out_dtype),
                   jax.ShapeDtypeStruct((n, d_pad), out_dtype)),
        grid_spec=pltpu.PrefetchScalarGridSpec(
            num_scalar_prefetch=0,
            grid=(nj, nk),
            in_specs=[
                pl.BlockSpec((bk, td), lambda j, k: (k, j)),   # z1
                pl.BlockSpec((bk, td), lambda j, k: (k, j)),   # z2
                pl.BlockSpec((1, td), lambda j, k: (0, j)),    # mean(z1)
                pl.BlockSpec((1, td), lambda j, k: (0, j)),    # rstd(z1)
                pl.BlockSpec((1, td), lambda j, k: (0, j)),    # mean(z2)
                pl.BlockSpec((1, td), lambda j, k: (0, j)),    # rstd(z2)
            ],
            out_specs=[pl.BlockSpec((bk, td), lambda j, k: (k, j))
                       for _ in range(2)],
        ),
        compiler_params=pltpu.CompilerParams(
            dimension_semantics=("parallel", "parallel"),
            vmem_limit_bytes=vmem_limit),
        cost_estimate=pl.CostEstimate(
            flops=int(4 * n * d_pad),
            transcendentals=0,
            bytes_accessed=int(2 * n * d_pad * (4 + elem) + 4 * d_pad * 4)),
    )(z1p, z2p, m1, r1, m2, r2)


# ---------------------------------------------------------------------------
# Pass 2: tiled cross-correlation + algebraic on/off-diagonal reduction.
# ---------------------------------------------------------------------------
def _corr_loss_kernel(zn1_ref, zn2_ref, out_ref, acc_ref, *,
                      bk, inv_batch, lambd, z1_is_panel):
    i = pl.program_id(0)
    j = pl.program_id(1)
    k = pl.program_id(2)

    @pl.when(k == 0)
    def _init():
        acc_ref[...] = jnp.zeros_like(acc_ref)

    if z1_is_panel:
        start = pl.multiple_of(k * bk, bk)
        a = zn1_ref[pl.ds(start, bk), :]       # slice of the resident column panel
    else:
        a = zn1_ref[...]
    b = zn2_ref[...]

    # Contract over the batch axis of BOTH operands -> (td, td) c-tile.
    acc_ref[...] += lax.dot_general(
        a, b,
        dimension_numbers=(((0,), (0,)), ((), ())),
        preferred_element_type=jnp.float32)

    @pl.when(k == pl.num_programs(2) - 1)
    def _finalize():
        c = acc_ref[...] * inv_batch
        # lambd * sum(c^2) over this tile (covers the whole off-diag term).
        partial = lambd * jnp.sum(c * c)

        @pl.when(i != j)
        def _offdiag_tile():
            out_ref[...] = jnp.full(out_ref.shape, partial, jnp.float32)

        @pl.when(i == j)
        def _diag_tile():
            td = acc_ref.shape[0]
            row = lax.broadcasted_iota(jnp.int32, (td, td), 0)
            col = lax.broadcasted_iota(jnp.int32, (td, td), 1)
            # sum_diag[(1 - lambd) c_ii^2 - 2 c_ii + 1]  (local diag == global here)
            diag_terms = jnp.where(
                row == col, (1.0 - lambd) * c * c - 2.0 * c + 1.0, 0.0)
            out_ref[...] = jnp.full(
                out_ref.shape, partial + jnp.sum(diag_terms), jnp.float32)


def _corr_call(zn1, zn2, *, td, bk, inv_batch, lambd, z1_is_panel, vmem_limit):
    n, d_pad = zn1.shape
    ni = nj = d_pad // td
    nk = n // bk
    sh, sw = _STAMP
    elem = jnp.dtype(zn1.dtype).itemsize

    kernel = functools.partial(_corr_loss_kernel, bk=bk, inv_batch=inv_batch,
                               lambd=lambd, z1_is_panel=z1_is_panel)

    if z1_is_panel:
        # Resident column panel: block index depends only on i, so z1 is
        # re-DMAed only when i changes (read ~once from HBM).
        z1_spec = pl.BlockSpec((n, td), lambda i, j, k: (0, i))
        z1_bytes = ni * n * td * elem
    else:
        z1_spec = pl.BlockSpec((bk, td), lambda i, j, k: (k, i))
        z1_bytes = ni * nj * nk * bk * td * elem

    try:  # 3-deep pipeline on the streamed slab hides (i, j)-boundary bubbles.
        z2_spec = pl.BlockSpec((bk, td), lambda i, j, k: (k, j),
                               pipeline_mode=pl.Buffered(3))
    except TypeError:
        z2_spec = pl.BlockSpec((bk, td), lambda i, j, k: (k, j))

    partials = pl.pallas_call(
        kernel,
        out_shape=jax.ShapeDtypeStruct((ni * sh, nj * sw), jnp.float32),
        grid_spec=pltpu.PrefetchScalarGridSpec(
            num_scalar_prefetch=0,
            grid=(ni, nj, nk),
            in_specs=[z1_spec, z2_spec],
            out_specs=pl.BlockSpec((sh, sw), lambda i, j, k: (i, j)),
            scratch_shapes=[pltpu.VMEM((td, td), jnp.float32)],
        ),
        compiler_params=pltpu.CompilerParams(
            dimension_semantics=("parallel", "parallel", "arbitrary"),
            vmem_limit_bytes=vmem_limit),
        cost_estimate=pl.CostEstimate(
            flops=int(2 * n * d_pad * d_pad),
            transcendentals=0,
            bytes_accessed=int(z1_bytes + ni * n * d_pad * elem
                               + ni * nj * sh * sw * 4)),
    )(zn1, zn2)

    # Each (i, j) tile stamped its scalar over an (8,128) block; pick one
    # representative per tile and reduce (tiny op outside the kernel).
    return jnp.sum(partials[::sh, ::sw])


# ---------------------------------------------------------------------------
# Wrapper
# ---------------------------------------------------------------------------
def barlow_twins_loss(z1, z2, *, batch_size=None, lambd=0.0051, eps=1e-5,
                      dim_tile=1024, batch_tile=512, use_bf16=True):
    assert z1.shape == z2.shape and z1.ndim == 2
    n, d = z1.shape
    if batch_size is None:
        # The PyTorch module divides by a constructor-supplied batch_size;
        # default to the actual number of rows.
        batch_size = n
    z1 = z1.astype(jnp.float32)
    z2 = z2.astype(jnp.float32)

    # Pad the feature dim to a lane multiple.  Padded columns normalize to
    # exactly 0, contributing exactly (d_pad - d) to the on-diagonal term;
    # subtract it at the end (exact correction).
    d_pad = ((d + 127) // 128) * 128
    if d_pad != d:
        pad = d_pad - d
        z1 = jnp.pad(z1, ((0, 0), (0, pad)))
        z2 = jnp.pad(z2, ((0, 0), (0, pad)))

    elem = 2 if use_bf16 else 4
    try:
        vmem_phys = int(pltpu.get_tpu_info().vmem_capacity_bytes)
    except Exception:
        vmem_phys = 64 * 2**20          # v7x (most restrictive) fallback
    budget = int(vmem_phys * 0.7)

    # 256-alignment fills the v6e/v7x 256x256 MXU (128 already fills v5e's).
    align_d = 256 if (d_pad % 256 == 0 and dim_tile % 256 == 0) else 128
    align_b = 16 if use_bf16 else 8
    td = _pick_tile(d_pad, dim_tile, align_d)
    bk = _pick_tile(n, batch_tile, align_b)

    def p2_workset(td_, bk_, panel):
        z1_buf = (2 * n * td_ * elem) if panel else (2 * bk_ * td_ * elem)
        return (z1_buf                               # zn1 panel / slab buffers
                + 3 * bk_ * td_ * elem               # zn2 slab, 3-deep
                + td_ * td_ * 4                      # f32 accumulator tile
                + 2 * _STAMP[0] * _STAMP[1] * 4)     # output stamp

    # Shrink td, then bk, until the per-step working set fits the VMEM budget.
    while p2_workset(td, bk, True) > budget and td > align_d:
        new_td = _pick_tile(d_pad, max(td // 2, align_d), align_d)
        if new_td >= td:
            break
        td = new_td
    while p2_workset(td, bk, True) > budget and bk > align_b:
        new_bk = _pick_tile(n, max(bk // 2, align_b), align_b)
        if new_bk >= bk:
            break
        bk = new_bk

    # Keep the zn1 column panel resident only if it fits; otherwise stream it.
    z1_is_panel = p2_workset(td, bk, True) <= budget

    def limit(ws):
        return int(min(vmem_phys * 0.85, max(32 * 2**20, int(1.5 * ws))))

    p1a_ws = 4 * bk * td * 4 + 16 * td * 4
    p1b_ws = 4 * bk * td * 4 + 4 * bk * td * elem + 16 * td * 4
    p2_ws = p2_workset(td, bk, z1_is_panel)

    # --- pass 1a: fused BatchNorm statistics for both views ----------------
    m1, r1, m2, r2 = _stats_call(z1, z2, td=td, bk=bk, eps=eps,
                                 vmem_limit=limit(p1a_ws))

    # --- pass 1b: pre-normalize + cast once ---------------------------------
    zn_dtype = jnp.bfloat16 if use_bf16 else jnp.float32
    zn1, zn2 = _normalize_call(z1, z2, m1, r1, m2, r2, td=td, bk=bk,
                               out_dtype=zn_dtype, vmem_limit=limit(p1b_ws))

    # --- pass 2: tiled correlation + loss reduction --------------------------
    loss = _corr_call(zn1, zn2, td=td, bk=bk,
                      inv_batch=1.0 / float(batch_size), lambd=float(lambd),
                      z1_is_panel=z1_is_panel, vmem_limit=limit(p2_ws))

    # Exact removal of the padded-column on-diagonal contribution.
    return loss - float(d_pad - d)


# ---------------------------------------------------------------------------
# Plain-JAX reference (mirrors the PyTorch module).
# ---------------------------------------------------------------------------
def _reference_loss(z1, z2, batch_size, lambd=0.0051, eps=1e-5):
    def bn(z):
        m = jnp.mean(z, axis=0, keepdims=True)
        v = jnp.mean((z - m) ** 2, axis=0, keepdims=True)
        return (z - m) / jnp.sqrt(v + eps)
    c = bn(z1).T @ bn(z2) / batch_size
    on = jnp.sum((jnp.diag(c) - 1.0) ** 2)
    off = jnp.sum(c ** 2) - jnp.sum(jnp.diag(c) ** 2)
    return on + lambd * off


if __name__ == "__main__":
    key = jax.random.PRNGKey(0)
    k1, k2, k3, k4 = jax.random.split(key, 4)

    # Small shapes consistent with the module: (batch, dim_size).
    batch, dim = 8, 32
    z1 = jax.random.normal(k1, (batch, dim), dtype=jnp.float32)
    z2 = jax.random.normal(k2, (batch, dim), dtype=jnp.float32)
    ref = _reference_loss(z1, z2, batch)

    # f32 MXU path (bit-tight vs. the f32 reference).
    loss_f32 = barlow_twins_loss(z1, z2, batch_size=batch, use_bf16=False)
    loss_f32 = jax.block_until_ready(loss_f32)
    assert jnp.allclose(loss_f32, ref, rtol=1e-4, atol=1e-4), (loss_f32, ref)

    # Default path: pre-normalized bf16 activations feeding the MXU (f32 acc).
    loss_bf16 = barlow_twins_loss(z1, z2, batch_size=batch)
    loss_bf16 = jax.block_until_ready(loss_bf16)
    assert jnp.allclose(loss_bf16, ref, rtol=3e-2, atol=5e-2), (loss_bf16, ref)

    # Exercise the multi-tile / batch-chunked path (pass-2 grid = 2 x 2 x 2,
    # resident zn1 panel + streamed zn2 slabs, diag and off-diag tiles).
    batch2, dim2 = 64, 256
    w1 = jax.random.normal(k3, (batch2, dim2), dtype=jnp.float32)
    w2 = jax.random.normal(k4, (batch2, dim2), dtype=jnp.float32)
    loss2 = barlow_twins_loss(w1, w2, batch_size=batch2, dim_tile=128,
                              batch_tile=32, use_bf16=False)
    loss2 = jax.block_until_ready(loss2)
    ref2 = _reference_loss(w1, w2, batch2)
    assert jnp.allclose(loss2, ref2, rtol=1e-3, atol=1e-3), (loss2, ref2)

    print("KERNEL_OK")
</pallas_src>

<mosaic_0001>
module attributes {stable_mosaic.version = 11 : i64} {
  func.func @_stats_kernel(%arg0: i32, %arg1: i32, %arg2: memref<8x128xf32, #tpu.memory_space<vmem>>, %arg3: memref<8x128xf32, #tpu.memory_space<vmem>>, %arg4: memref<1x128xf32, #tpu.memory_space<vmem>>, %arg5: memref<1x128xf32, #tpu.memory_space<vmem>>, %arg6: memref<1x128xf32, #tpu.memory_space<vmem>>, %arg7: memref<1x128xf32, #tpu.memory_space<vmem>>, %arg8: memref<1x128xf32, #tpu.memory_space<vmem>>, %arg9: memref<1x128xf32, #tpu.memory_space<vmem>>, %arg10: memref<1x128xf32, #tpu.memory_space<vmem>>, %arg11: memref<1x128xf32, #tpu.memory_space<vmem>>) attributes {dimension_semantics = [#tpu.dimension_semantics<parallel>, #tpu.dimension_semantics<arbitrary>], iteration_bounds = array<i64: 1, 1>, scalar_prefetch = 0 : i64, scratch_operands = 4 : i64, tpu.core_type = #tpu.core_type<tc>, window_params = [{transform_indices = @transform_0, window_bounds = array<i64: 8, 128>}, {transform_indices = @transform_1, window_bounds = array<i64: 8, 128>}, {transform_indices = @transform_2, window_bounds = array<i64: 1, 128>}, {transform_indices = @transform_3, window_bounds = array<i64: 1, 128>}, {transform_indices = @transform_4, window_bounds = array<i64: 1, 128>}, {transform_indices = @transform_5, window_bounds = array<i64: 1, 128>}]} {
    %c0_i32 = arith.constant 0 : i32
    %0 = arith.cmpi eq, %arg1, %c0_i32 : i32
    %1 = arith.extui %0 : i1 to i32
    %c0_i32_0 = arith.constant 0 : i32
    %2 = arith.cmpi ne, %1, %c0_i32_0 : i32
    scf.if %2 {
      %cst_25 = arith.constant 0.000000e+00 : f32
      %30 = vector.broadcast %cst_25 : f32 to vector<1x128xf32>
      %c0_26 = arith.constant 0 : index
      %c0_27 = arith.constant 0 : index
      %31 = vector.load %arg8[%c0_26, %c0_27] : memref<1x128xf32, #tpu.memory_space<vmem>>, vector<1x128xf32>
      tpu.vector_store %arg8[%c0_26, %c0_27], %30 {strides = array<i32>} : memref<1x128xf32, #tpu.memory_space<vmem>>, vector<1x128xf32>,
      %cst_28 = arith.constant 0.000000e+00 : f32
      %32 = vector.broadcast %cst_28 : f32 to vector<1x128xf32>
      %c0_29 = arith.constant 0 : index
      %c0_30 = arith.constant 0 : index
      %33 = vector.load %arg9[%c0_29, %c0_30] : memref<1x128xf32, #tpu.memory_space<vmem>>, vector<1x128xf32>
      tpu.vector_store %arg9[%c0_29, %c0_30], %32 {strides = array<i32>} : memref<1x128xf32, #tpu.memory_space<vmem>>, vector<1x128xf32>,
      %cst_31 = arith.constant 0.000000e+00 : f32
      %34 = vector.broadcast %cst_31 : f32 to vector<1x128xf32>
      %c0_32 = arith.constant 0 : index
      %c0_33 = arith.constant 0 : index
      %35 = vector.load %arg10[%c0_32, %c0_33] : memref<1x128xf32, #tpu.memory_space<vmem>>, vector<1x128xf32>
      tpu.vector_store %arg10[%c0_32, %c0_33], %34 {strides = array<i32>} : memref<1x128xf32, #tpu.memory_space<vmem>>, vector<1x128xf32>,
      %cst_34 = arith.constant 0.000000e+00 : f32
      %36 = vector.broadcast %cst_34 : f32 to vector<1x128xf32>
      %c0_35 = arith.constant 0 : index
      %c0_36 = arith.constant 0 : index
      %37 = vector.load %arg11[%c0_35, %c0_36] : memref<1x128xf32, #tpu.memory_space<vmem>>, vector<1x128xf32>
      tpu.vector_store %arg11[%c0_35, %c0_36], %36 {strides = array<i32>} : memref<1x128xf32, #tpu.memory_space<vmem>>, vector<1x128xf32>,
    } else {
    }
    %c0 = arith.constant 0 : index
    %c0_1 = arith.constant 0 : index
    %3 = vector.load %arg2[%c0, %c0_1] : memref<8x128xf32, #tpu.memory_space<vmem>>, vector<8x128xf32>
    %c0_2 = arith.constant 0 : index
    %c0_3 = arith.constant 0 : index
    %4 = vector.load %arg3[%c0_2, %c0_3] : memref<8x128xf32, #tpu.memory_space<vmem>>, vector<8x128xf32>
    %c0_4 = arith.constant 0 : index
    %c0_5 = arith.constant 0 : index
    %5 = vector.load %arg8[%c0_4, %c0_5] : memref<1x128xf32, #tpu.memory_space<vmem>>, vector<1x128xf32>
    %cst = arith.constant dense<0.000000e+00> : vector<128xf32>
    %6 = vector.multi_reduction <add>, %3, %cst [0] : vector<8x128xf32> to vector<128xf32>
    %7 = vector.shape_cast %6 : vector<128xf32> to vector<1x128xf32>
    %8 = arith.addf %5, %7 : vector<1x128xf32>
    %c0_6 = arith.constant 0 : index
    %c0_7 = arith.constant 0 : index
    %9 = vector.load %arg8[%c0_6, %c0_7] : memref<1x128xf32, #tpu.memory_space<vmem>>, vector<1x128xf32>
    tpu.vector_store %arg8[%c0_6, %c0_7], %8 {strides = array<i32>} : memref<1x128xf32, #tpu.memory_space<vmem>>, vector<1x128xf32>,
    %c0_8 = arith.constant 0 : index
    %c0_9 = arith.constant 0 : index
    %10 = vector.load %arg9[%c0_8, %c0_9] : memref<1x128xf32, #tpu.memory_space<vmem>>, vector<1x128xf32>
    %11 = arith.mulf %3, %3 : vector<8x128xf32>
    %cst_10 = arith.constant dense<0.000000e+00> : vector<128xf32>
    %12 = vector.multi_reduction <add>, %11, %cst_10 [0] : vector<8x128xf32> to vector<128xf32>
    %13 = vector.shape_cast %12 : vector<128xf32> to vector<1x128xf32>
    %14 = arith.addf %10, %13 : vector<1x128xf32>
    %c0_11 = arith.constant 0 : index
    %c0_12 = arith.constant 0 : index
    %15 = vector.load %arg9[%c0_11, %c0_12] : memref<1x128xf32, #tpu.memory_space<vmem>>, vector<1x128xf32>
    tpu.vector_store %arg9[%c0_11, %c0_12], %14 {strides = array<i32>} : memref<1x128xf32, #tpu.memory_space<vmem>>, vector<1x128xf32>,
    %c0_13 = arith.constant 0 : index
    %c0_14 = arith.constant 0 : index
    %16 = vector.load %arg10[%c0_13, %c0_14] : memref<1x128xf32, #tpu.memory_space<vmem>>, vector<1x128xf32>
    %cst_15 = arith.constant dense<0.000000e+00> : vector<128xf32>
    %17 = vector.multi_reduction <add>, %4, %cst_15 [0] : vector<8x128xf32> to vector<128xf32>
    %18 = vector.shape_cast %17 : vector<128xf32> to vector<1x128xf32>
    %19 = arith.addf %16, %18 : vector<1x128xf32>
    %c0_16 = arith.constant 0 : index
    %c0_17 = arith.constant 0 : index
    %20 = vector.load %arg10[%c0_16, %c0_17] : memref<1x128xf32, #tpu.memory_space<vmem>>, vector<1x128xf32>
    tpu.vector_store %arg10[%c0_16, %c0_17], %19 {strides = array<i32>} : memref<1x128xf32, #tpu.memory_space<vmem>>, vector<1x128xf32>,
    %c0_18 = arith.constant 0 : index
    %c0_19 = arith.constant 0 : index
    %21 = vector.load %arg11[%c0_18, %c0_19] : memref<1x128xf32, #tpu.memory_space<vmem>>, vector<1x128xf32>
    %22 = arith.mulf %4, %4 : vector<8x128xf32>
    %cst_20 = arith.constant dense<0.000000e+00> : vector<128xf32>
    %23 = vector.multi_reduction <add>, %22, %cst_20 [0] : vector<8x128xf32> to vector<128xf32>
    %24 = vector.shape_cast %23 : vector<128xf32> to vector<1x128xf32>
    %25 = arith.addf %21, %24 : vector<1x128xf32>
    %c0_21 = arith.constant 0 : index
    %c0_22 = arith.constant 0 : index
    %26 = vector.load %arg11[%c0_21, %c0_22] : memref<1x128xf32, #tpu.memory_space<vmem>>, vector<1x128xf32>
    tpu.vector_store %arg11[%c0_21, %c0_22], %25 {strides = array<i32>} : memref<1x128xf32, #tpu.memory_space<vmem>>, vector<1x128xf32>,
    %c0_i32_23 = arith.constant 0 : i32
    %27 = arith.cmpi eq, %arg1, %c0_i32_23 : i32
    %28 = arith.extui %27 : i1 to i32
    %c0_i32_24 = arith.constant 0 : i32
    %29 = arith.cmpi ne, %28, %c0_i32_24 : i32
    scf.if %29 {
      %c0_25 = arith.constant 0 : index
      %c0_26 = arith.constant 0 : index
      %30 = vector.load %arg8[%c0_25, %c0_26] : memref<1x128xf32, #tpu.memory_space<vmem>>, vector<1x128xf32>
      %cst_27 = arith.constant 1.250000e-01 : f32
      %31 = vector.broadcast %cst_27 : f32 to vector<1x128xf32>
      %32 = arith.mulf %30, %31 : vector<1x128xf32>
      %c0_28 = arith.constant 0 : index
      %c0_29 = arith.constant 0 : index
      %33 = vector.load %arg9[%c0_28, %c0_29] : memref<1x128xf32, #tpu.memory_space<vmem>>, vector<1x128xf32>
      %cst_30 = arith.constant 1.250000e-01 : f32
      %34 = vector.broadcast %cst_30 : f32 to vector<1x128xf32>
      %35 = arith.mulf %33, %34 : vector<1x128xf32>
      %36 = arith.mulf %32, %32 : vector<1x128xf32>
      %37 = arith.subf %35, %36 : vector<1x128xf32>
      %cst_31 = arith.constant 0.000000e+00 : f32
      %38 = vector.broadcast %cst_31 : f32 to vector<1x128xf32>
      %39 = arith.maximumf %37, %38 : vector<1x128xf32>
      %c0_32 = arith.constant 0 : index
      %c0_33 = arith.constant 0 : index
      %40 = vector.load %arg4[%c0_32, %c0_33] : memref<1x128xf32, #tpu.memory_space<vmem>>, vector<1x128xf32>
      tpu.vector_store %arg4[%c0_32, %c0_33], %32 {strides = array<i32>} : memref<1x128xf32, #tpu.memory_space<vmem>>, vector<1x128xf32>,
      %cst_34 = arith.constant 9.99999974E-6 : f32
      %41 = vector.broadcast %cst_34 : f32 to vector<1x128xf32>
      %42 = arith.addf %39, %41 : vector<1x128xf32>
      %43 = math.rsqrt %42 : vector<1x128xf32>
      %c0_35 = arith.constant 0 : index
      %c0_36 = arith.constant 0 : index
      %44 = vector.load %arg5[%c0_35, %c0_36] : memref<1x128xf32, #tpu.memory_space<vmem>>, vector<1x128xf32>
      tpu.vector_store %arg5[%c0_35, %c0_36], %43 {strides = array<i32>} : memref<1x128xf32, #tpu.memory_space<vmem>>, vector<1x128xf32>,
      %c0_37 = arith.constant 0 : index
      %c0_38 = arith.constant 0 : index
      %45 = vector.load %arg10[%c0_37, %c0_38] : memref<1x128xf32, #tpu.memory_space<vmem>>, vector<1x128xf32>
      %cst_39 = arith.constant 1.250000e-01 : f32
      %46 = vector.broadcast %cst_39 : f32 to vector<1x128xf32>
      %47 = arith.mulf %45, %46 : vector<1x128xf32>
      %c0_40 = arith.constant 0 : index
      %c0_41 = arith.constant 0 : index
      %48 = vector.load %arg11[%c0_40, %c0_41] : memref<1x128xf32, #tpu.memory_space<vmem>>, vector<1x128xf32>
      %cst_42 = arith.constant 1.250000e-01 : f32
      %49 = vector.broadcast %cst_42 : f32 to vector<1x128xf32>
      %50 = arith.mulf %48, %49 : vector<1x128xf32>
      %51 = arith.mulf %47, %47 : vector<1x128xf32>
      %52 = arith.subf %50, %51 : vector<1x128xf32>
      %cst_43 = arith.constant 0.000000e+00 : f32
      %53 = vector.broadcast %cst_43 : f32 to vector<1x128xf32>
      %54 = arith.maximumf %52, %53 : vector<1x128xf32>
      %c0_44 = arith.constant 0 : index
      %c0_45 = arith.constant 0 : index
      %55 = vector.load %arg6[%c0_44, %c0_45] : memref<1x128xf32, #tpu.memory_space<vmem>>, vector<1x128xf32>
      tpu.vector_store %arg6[%c0_44, %c0_45], %47 {strides = array<i32>} : memref<1x128xf32, #tpu.memory_space<vmem>>, vector<1x128xf32>,
      %cst_46 = arith.constant 9.99999974E-6 : f32
      %56 = vector.broadcast %cst_46 : f32 to vector<1x128xf32>
      %57 = arith.addf %54, %56 : vector<1x128xf32>
      %58 = math.rsqrt %57 : vector<1x128xf32>
      %c0_47 = arith.constant 0 : index
      %c0_48 = arith.constant 0 : index
      %59 = vector.load %arg7[%c0_47, %c0_48] : memref<1x128xf32, #tpu.memory_space<vmem>>, vector<1x128xf32>
      tpu.vector_store %arg7[%c0_47, %c0_48], %58 {strides = array<i32>} : memref<1x128xf32, #tpu.memory_space<vmem>>, vector<1x128xf32>,
    } else {
    }
    return
  }
  func.func @transform_0(%arg0: i32, %arg1: i32) -> (i32, i32) {
    %c0_i32 = arith.constant 0 : i32
    return %arg1, %arg0 : i32, i32
  }
  func.func @transform_1(%arg0: i32, %arg1: i32) -> (i32, i32) {
    %c0_i32 = arith.constant 0 : i32
    return %arg1, %arg0 : i32, i32
  }
  func.func @transform_2(%arg0: i32, %arg1: i32) -> (i32, i32) {
    %c0_i32 = arith.constant 0 : i32
    %c0_i32_0 = arith.constant 0 : i32
    return %c0_i32, %arg0 : i32, i32
  }
  func.func @transform_3(%arg0: i32, %arg1: i32) -> (i32, i32) {
    %c0_i32 = arith.constant 0 : i32
    %c0_i32_0 = arith.constant 0 : i32
    return %c0_i32, %arg0 : i32, i32
  }
  func.func @transform_4(%arg0: i32, %arg1: i32) -> (i32, i32) {
    %c0_i32 = arith.constant 0 : i32
    %c0_i32_0 = arith.constant 0 : i32
    return %c0_i32, %arg0 : i32, i32
  }
  func.func @transform_5(%arg0: i32, %arg1: i32) -> (i32, i32) {
    %c0_i32 = arith.constant 0 : i32
    %c0_i32_0 = arith.constant 0 : i32
    return %c0_i32, %arg0 : i32, i32
  }
}

</mosaic_0001>

<llo_original>
// kernel: tpu_custom_call.1
$region0: #{tpu_custom_call.1}
  #allocation0 [shape = 'u32[]', space=smem, size = 0x4, offset = 0x4, fixed_abs, tag = 'smem constant byte address 0x4 - core index']
  #allocation1 [shape = 'u32[144,128]{1,0:T(1,128)}', space=vmem, size = 0x12000, scoped, tag = 'internal scratch']
  #allocation2 [shape = 'f32[1,128]{1,0:T(1,128)}', space=vmem, size = 0x200, scoped, tag = 'scratch operand']
  #allocation3 [shape = 'f32[1,128]{1,0:T(1,128)}', space=vmem, size = 0x200, scoped, tag = 'scratch operand']
  #allocation4 [shape = 'f32[1,128]{1,0:T(1,128)}', space=vmem, size = 0x200, scoped, tag = 'scratch operand']
  #allocation5 [shape = 'f32[1,128]{1,0:T(1,128)}', space=vmem, size = 0x200, scoped, tag = 'scratch operand']
  %s0 = inlined_call_operand.hbm [shape: f32[8,128], index: 0, kind: input, shape index: {}]
  %s1 = inlined_call_operand.hbm [shape: f32[8,128], index: 1, kind: input, shape index: {}]
  %s2 = inlined_call_operand.hbm [shape: f32[1,128], index: 2, kind: output, shape index: {0}]
  %s3 = inlined_call_operand.hbm [shape: f32[1,128], index: 3, kind: output, shape index: {1}]
  %s4 = inlined_call_operand.hbm [shape: f32[1,128], index: 4, kind: output, shape index: {2}]
  %s5 = inlined_call_operand.hbm [shape: f32[1,128], index: 5, kind: output, shape index: {3}]
  %6 = xla_tuple %s2, %s3, %s4, %s5
  %s7 = sld [smem:[#allocation0]]
  $region58: #{tpu_custom_call.1} parent=0
    _
  %s9 = ssub.s32 1, %s7
  %s10 = scalar_select 0, %s9, %s7
  $region1: #{tpu_custom_call.1} parent=0
    #allocation6 [shape = 'u8[4096]{0}', space=vmem, size = 0x1000, scoped, tag = 'input window, operand 0, single buffered']
    #allocation7 [shape = 's32[1]{0}', space=sflag, size = 0x4, scoped, tag = 'scoped memory for tpu_custom_call.1']
    #allocation8 [shape = 's32[1]{0}', space=sflag, size = 0x4, scoped, tag = 'scoped memory for tpu_custom_call.1']
    #allocation9 [shape = 'u8[4096]{0}', space=vmem, size = 0x1000, scoped, tag = 'input window, operand 1, single buffered']
    #allocation10 [shape = 's32[1]{0}', space=sflag, size = 0x4, scoped, tag = 'scoped memory for tpu_custom_call.1']
    #allocation11 [shape = 'u8[512]{0}', space=vmem, size = 0x400, scoped, tag = 'output window, operand 0, single buffered']
    #allocation12 [shape = 'u8[512]{0}', space=vmem, size = 0x400, scoped, tag = 'output window, operand 1, single buffered']
    #allocation13 [shape = 's32[1]{0}', space=sflag, size = 0x4, scoped, tag = 'scoped memory for tpu_custom_call.1']
    #allocation14 [shape = 'u8[512]{0}', space=vmem, size = 0x400, scoped, tag = 'output window, operand 2, single buffered']
    #allocation15 [shape = 'u8[512]{0}', space=vmem, size = 0x400, scoped, tag = 'output window, operand 3, single buffered']
    #allocation16 [shape = 's32[1]{0}', space=sflag, size = 0x4, scoped, tag = 'scoped memory for tpu_custom_call.1']
    %11 = vsyncpa [#allocation7], 0
    %12 = vsyncpa [#allocation10], 0
    %13 = vsyncpa [#allocation8], 0
    %14 = vsyncpa [#allocation13], 0
    %15 = vsyncpa [#allocation16], 0
    // Predicated region
    $region2: #{tpu_custom_call.1} parent=1 // pred_check
      _
    $region3: #{tpu_custom_call.1} parent=1 // pred_check_branch
      %17 = sbr.rel (0) target = $region5
    $region4: #{tpu_custom_call.1} parent=1 // pred_region
      %s19 = ssub.s32 128, 128
      %20 = vsyncadd [#allocation7], %s19
      %s22 = sshll.u32 [#allocation6], 4
      %s23 = int_to_ptr.vmem [resolvable:$true] %s22
      %25 = dma.hbm_to_vmem [thread:$0]  %s0, 128, %s23, [#allocation7]
    $region5: #{tpu_custom_call.1} parent=1 // pred_fallthru
      _
    // Predicated region
    $region6: #{tpu_custom_call.1} parent=1 // pred_check
      _
    $region7: #{tpu_custom_call.1} parent=1 // pred_check_branch
      %27 = sbr.rel (0) target = $region9
    $region8: #{tpu_custom_call.1} parent=1 // pred_region
      %s29 = ssub.s32 128, 128
      %30 = vsyncadd [#allocation10], %s29
      %s32 = sshll.u32 [#allocation9], 4
      %s33 = int_to_ptr.vmem [resolvable:$true] %s32
      %35 = dma.hbm_to_vmem [thread:$0]  %s1, 128, %s33, [#allocation10]
    $region9: #{tpu_custom_call.1} parent=1 // pred_fallthru
      _
    // Predicated region
    $region10: #{tpu_custom_call.1} parent=1 // pred_check
      _
    $region11: #{tpu_custom_call.1} parent=1 // pred_check_branch
      %37 = sbr.rel (0) target = $region13
    $region12: #{tpu_custom_call.1} parent=1 // pred_region
      %38 = dma.done [#allocation7], 128
    $region13: #{tpu_custom_call.1} parent=1 // pred_fallthru
      _
    // Predicated region
    $region14: #{tpu_custom_call.1} parent=1 // pred_check
      _
    $region15: #{tpu_custom_call.1} parent=1 // pred_check_branch
      %40 = sbr.rel (0) target = $region17
    $region16: #{tpu_custom_call.1} parent=1 // pred_region
      %41 = dma.done [#allocation10], 128
    $region17: #{tpu_custom_call.1} parent=1 // pred_fallthru
      _
    %p42 = scmp.eq.s32.totalorder 0, 0
    // Predicated region
    $region18: #{tpu_custom_call.1} parent=1 // pred_check
      %p43 = pneg %p42
    $region19: #{tpu_custom_call.1} parent=1 // pred_check_branch
      %45 = sbr.rel (%p43) target = $region21
    $region20: #{tpu_custom_call.1} parent=1 // pred_region
      %46 = vst [vmem:[#allocation2] sm:$0x1] 0.0
      %47 = vst [vmem:[#allocation3] sm:$0x1] 0.0
      %48 = vst [vmem:[#allocation4] sm:$0x1] 0.0
      %49 = vst [vmem:[#allocation5] sm:$0x1] 0.0
    $region21: #{tpu_custom_call.1} parent=1 // pred_fallthru
      _
    %v50 = vld [vmem:[#allocation6] sm:$0xff]
    %v51 = vld [vmem:[#allocation9] sm:$0xff]
    %v52 = vld [vmem:[#allocation2] sm:$0x1]
    %v53 = vrot.slane %v50, 4
    %v54 = vadd.f32 %v50, %v53
    %v55 = vrot.slane %v54, 2
    %v56 = vadd.f32 %v54, %v55
    %v57 = vrot.slane %v56, 1
    %v58 = vadd.f32 %v56, %v57
    %v59 = vadd.f32 %v52, %v58
    %60 = vst [vmem:[#allocation2] sm:$0x1] %v59
    %v61 = vld [vmem:[#allocation3] sm:$0x1]
    %v62 = vmul.f32 %v50, %v50
    %v63 = vrot.slane %v62, 4
    %v64 = vadd.f32 %v62, %v63
    %v65 = vrot.slane %v64, 2
    %v66 = vadd.f32 %v64, %v65
    %v67 = vrot.slane %v66, 1
    %v68 = vadd.f32 %v66, %v67
    %v69 = vadd.f32 %v61, %v68
    %70 = vst [vmem:[#allocation3] sm:$0x1] %v69
    %v71 = vld [vmem:[#allocation4] sm:$0x1]
    %v72 = vrot.slane %v51, 4
    %v73 = vadd.f32 %v51, %v72
    %v74 = vrot.slane %v73, 2
    %v75 = vadd.f32 %v73, %v74
    %v76 = vrot.slane %v75, 1
    %v77 = vadd.f32 %v75, %v76
    %v78 = vadd.f32 %v71, %v77
    %79 = vst [vmem:[#allocation4] sm:$0x1] %v78
    %v80 = vld [vmem:[#allocation5] sm:$0x1]
    %v81 = vmul.f32 %v51, %v51
    %v82 = vrot.slane %v81, 4
    %v83 = vadd.f32 %v81, %v82
    %v84 = vrot.slane %v83, 2
    %v85 = vadd.f32 %v83, %v84
    %v86 = vrot.slane %v85, 1
    %v87 = vadd.f32 %v85, %v86
    %v88 = vadd.f32 %v80, %v87
    %89 = vst [vmem:[#allocation5] sm:$0x1] %v88
    // Predicated region
    $region22: #{tpu_custom_call.1} parent=1 // pred_check
      %p90 = pneg %p42
    $region23: #{tpu_custom_call.1} parent=1 // pred_check_branch
      %92 = sbr.rel (%p90) target = $region25
    $region24: #{tpu_custom_call.1} parent=1 // pred_region
      %v93 = vld [vmem:[#allocation2] sm:$0x1]
      %v94 = vmul.f32 %v93, 0.125
      %v95 = vld [vmem:[#allocation3] sm:$0x1]
      %v96 = vmul.f32 %v95, 0.125
      %v97 = vmul.f32 %v94, %v94
      %v98 = vsub.f32 %v96, %v97
      %v99 = vmax.f32 %v98, 0.0
      %100 = vst [vmem:[#allocation11] sm:$0x1] %v94
      %v101 = vadd.f32 %v99, 1e-05
      %v102 = vrsqrt.pop %v101
      %103 = vst [vmem:[#allocation12] sm:$0x1] %v102
      %v104 = vld [vmem:[#allocation4] sm:$0x1]
      %v105 = vmul.f32 %v104, 0.125
      %v106 = vld [vmem:[#allocation5] sm:$0x1]
      %v107 = vmul.f32 %v106, 0.125
      %v108 = vmul.f32 %v105, %v105
      %v109 = vsub.f32 %v107, %v108
      %v110 = vmax.f32 %v109, 0.0
      %111 = vst [vmem:[#allocation14] sm:$0x1] %v105
      %v112 = vadd.f32 %v110, 1e-05
      %v113 = vrsqrt.pop %v112
      %114 = vst [vmem:[#allocation15] sm:$0x1] %v113
    $region25: #{tpu_custom_call.1} parent=1 // pred_fallthru
      _
    // Predicated region
    $region26: #{tpu_custom_call.1} parent=1 // pred_check
      _
    $region27: #{tpu_custom_call.1} parent=1 // pred_check_branch
      %116 = sbr.rel (0) target = $region29
    $region28: #{tpu_custom_call.1} parent=1 // pred_region
      %s118 = ssub.s32 16, 16
      %119 = vsyncadd [#allocation8], %s118
      %s121 = sshll.u32 [#allocation11], 4
      %s122 = int_to_ptr.vmem [resolvable:$true] %s121
      %124 = dma.vmem_to_hbm [thread:$0]  %s122, 16, %s2, [#allocation8]
    $region29: #{tpu_custom_call.1} parent=1 // pred_fallthru
      _
    // Predicated region
    $region30: #{tpu_custom_call.1} parent=1 // pred_check
      _
    $region31: #{tpu_custom_call.1} parent=1 // pred_check_branch
      %126 = sbr.rel (0) target = $region33
    $region32: #{tpu_custom_call.1} parent=1 // pred_region
      %s128 = ssub.s32 16, 16
      %129 = vsyncadd [#allocation13], %s128
      %s131 = sshll.u32 [#allocation12], 4
      %s132 = int_to_ptr.vmem [resolvable:$true] %s131
      %134 = dma.vmem_to_hbm [thread:$0]  %s132, 16, %s3, [#allocation13]
    $region33: #{tpu_custom_call.1} parent=1 // pred_fallthru
      _
    // Predicated region
    $region34: #{tpu_custom_call.1} parent=1 // pred_check
      _
    $region35: #{tpu_custom_call.1} parent=1 // pred_check_branch
      %136 = sbr.rel (0) target = $region37
    $region36: #{tpu_custom_call.1} parent=1 // pred_region
      %s138 = ssub.s32 16, 16
      %139 = vsyncadd [#allocation13], %s138
      %s141 = sshll.u32 [#allocation14], 4
      %s142 = int_to_ptr.vmem [resolvable:$true] %s141
      %144 = dma.vmem_to_hbm [thread:$0]  %s142, 16, %s4, [#allocation13]
    $region37: #{tpu_custom_call.1} parent=1 // pred_fallthru
      _
    // Predicated region
    $region38: #{tpu_custom_call.1} parent=1 // pred_check
      _
    $region39: #{tpu_custom_call.1} parent=1 // pred_check_branch
      %146 = sbr.rel (0) target = $region41
    $region40: #{tpu_custom_call.1} parent=1 // pred_region
      %s148 = ssub.s32 16, 16
      %149 = vsyncadd [#allocation16], %s148
      %s151 = sshll.u32 [#allocation15], 4
      %s152 = int_to_ptr.vmem [resolvable:$true] %s151
      %154 = dma.vmem_to_hbm [thread:$0]  %s152, 16, %s5, [#allocation16]
    $region41: #{tpu_custom_call.1} parent=1 // pred_fallthru
      _
    // Predicated region
    $region42: #{tpu_custom_call.1} parent=1 // pred_check
      _
    $region43: #{tpu_custom_call.1} parent=1 // pred_check_branch
      %156 = sbr.rel (0) target = $region45
    $region44: #{tpu_custom_call.1} parent=1 // pred_region
      %157 = dma.done [#allocation8], 16
    $region45: #{tpu_custom_call.1} parent=1 // pred_fallthru
      _
    // Predicated region
    $region46: #{tpu_custom_call.1} parent=1 // pred_check
      _
    $region47: #{tpu_custom_call.1} parent=1 // pred_check_branch
      %159 = sbr.rel (0) target = $region49
    $region48: #{tpu_custom_call.1} parent=1 // pred_region
      %160 = dma.done [#allocation13], 16
    $region49: #{tpu_custom_call.1} parent=1 // pred_fallthru
      _
    // Predicated region
    $region50: #{tpu_custom_call.1} parent=1 // pred_check
      _
    $region51: #{tpu_custom_call.1} parent=1 // pred_check_branch
      %162 = sbr.rel (0) target = $region53
    $region52: #{tpu_custom_call.1} parent=1 // pred_region
      %163 = dma.done [#allocation13], 16
    $region53: #{tpu_custom_call.1} parent=1 // pred_fallthru
      _
    // Predicated region
    $region54: #{tpu_custom_call.1} parent=1 // pred_check
      _
    $region55: #{tpu_custom_call.1} parent=1 // pred_check_branch
      %165 = sbr.rel (0) target = $region57
    $region56: #{tpu_custom_call.1} parent=1 // pred_region
      %166 = dma.done [#allocation16], 16
    $region57: #{tpu_custom_call.1} parent=1 // pred_fallthru
      _
    %167 = vsyncpa [#allocation7], 1
    %168 = vsyncpa [#allocation10], 1
    %169 = vsyncpa [#allocation8], 1
    %170 = vsyncpa [#allocation13], 1
    %171 = vsyncpa [#allocation16], 1

</llo_original>
